<compile_context>
chip_gen: v7x
topology: tpu7x:2x2x1
jax: 0.10.0
libtpu: 0.0.40
codegen_flags: <defaults>
</compile_context>

<pallas_src>
import jax
import jax.numpy as jnp
from jax.experimental import pallas as pl
from jax.experimental.pallas import tpu as pltpu


def _round_up(x, m):
    return ((x + m - 1) // m) * m


def _cdiv(a, b):
    return -(-a // b)


def _sublane(dtype):
    return {4: 8, 2: 16, 1: 32}.get(jnp.dtype(dtype).itemsize, 8)


# ---------------------------------------------------------------------------
# Kernels
# ---------------------------------------------------------------------------

def _fc_kernel_single_k(x_ref, w_ref, b_ref, o_ref):
    # Whole K resident: single matmul, fused bias + ReLU, output written once.
    acc = jnp.dot(x_ref[...], w_ref[...], preferred_element_type=jnp.float32)
    o_ref[...] = jnp.maximum(acc + b_ref[...], 0.0).astype(o_ref.dtype)


def _fc_kernel_multik_f32out(x_ref, w_ref, b_ref, o_ref):
    # K split across the grid; f32 output block doubles as the accumulator.
    k = pl.program_id(2)

    @pl.when(k == 0)
    def _init():
        o_ref[...] = jnp.zeros_like(o_ref)

    o_ref[...] += jnp.dot(x_ref[...], w_ref[...],
                          preferred_element_type=jnp.float32)

    @pl.when(k == pl.num_programs(2) - 1)
    def _epilogue():
        o_ref[...] = jnp.maximum(o_ref[...] + b_ref[...], 0.0)


def _fc_kernel_multik_acc(x_ref, w_ref, b_ref, o_ref, acc_ref):
    # K split across the grid; f32 VMEM scratch accumulator (non-f32 outputs).
    k = pl.program_id(2)

    @pl.when(k == 0)
    def _init():
        acc_ref[...] = jnp.zeros_like(acc_ref)

    acc_ref[...] += jnp.dot(x_ref[...], w_ref[...],
                            preferred_element_type=jnp.float32)

    @pl.when(k == pl.num_programs(2) - 1)
    def _epilogue():
        o_ref[...] = jnp.maximum(acc_ref[...] + b_ref[...], 0.0).astype(o_ref.dtype)


# ---------------------------------------------------------------------------
# Wrapper
# ---------------------------------------------------------------------------

def fc_forward(x, w, b, *, tile_m=None, tile_n=None, tile_k=None,
               compute_dtype=jnp.bfloat16):
    """Fused Linear + ReLU:  relu(x @ w + b).

    x: (..., K), w: (K, N) (i.e. PyTorch weight.T), b: (N,).
    Operands are cast to `compute_dtype` (bf16 by default); accumulation is f32.
    Output dtype matches x.dtype.
    """
    orig_shape = x.shape
    K = orig_shape[-1]
    Kw, N = w.shape
    assert K == Kw and b.shape == (N,)
    out_dtype = x.dtype

    x2 = x.reshape(-1, K)
    M = x2.shape[0]

    cd = jnp.dtype(compute_dtype)
    cd_isz = cd.itemsize
    out_isz = jnp.dtype(out_dtype).itemsize
    sl = _sublane(cd)

    Mr = _round_up(M, sl)
    Kr = _round_up(K, 128)
    Nr = _round_up(N, 128)

    # Generation-aware VMEM budget (v7x: 64 MiB/TC -> ~48 MiB; v5e/v6e -> ~96 MiB).
    try:
        vmem_cap = int(pltpu.get_tpu_info().vmem_capacity_bytes)
    except Exception:
        vmem_cap = 64 * 1024 * 1024
    vmem_limit = min((vmem_cap * 3) // 4, 100 * 1024 * 1024)
    budget = vmem_limit - (2 << 20)  # headroom for compiler-internal scratch

    # --- tile_m: for small/inference batches cover all of M so every weight
    # tile is streamed from HBM exactly once.
    if tile_m is not None:
        tm = min(_round_up(tile_m, sl), Mr)
    else:
        tm = Mr if Mr <= 512 else min(512, Mr)

    # --- tile_n (lane-dense, multiple of 128).
    if tile_n is not None:
        tn = min(_round_up(tile_n, 128), Nr)
    else:
        tn = min(512, Nr)
        # v7x megacore: keep the parallel (n, m) grid at >= 2 blocks when possible.
        if _cdiv(Nr, tn) * _cdiv(Mr, tm) <= 1 and Nr >= 512:
            tn = _round_up(Nr // 2, 128)

    # --- tile_k: prefer whole-K in one block (no reduction axis, no scratch).
    def buf_bytes(tm_, tn_, tk_, single_k_):
        bb = (2 * (tm_ * tk_ + tk_ * tn_) * cd_isz      # x + w, double-buffered
              + 2 * tm_ * tn_ * out_isz                  # output, double-buffered
              + 2 * 8 * tn_ * 4)                         # bias tile
        if (not single_k_) and jnp.dtype(out_dtype) != jnp.dtype(jnp.float32):
            bb += tm_ * tn_ * 4                          # f32 accumulator scratch
        return bb

    if tile_k is not None:
        tk = min(_round_up(tile_k, 128), Kr)
    elif buf_bytes(tm, tn, Kr, True) <= budget:
        tk = Kr
    else:
        tk = min(1024, Kr)

    def fits():
        return buf_bytes(tm, tn, tk, tk >= Kr) <= budget

    while not fits() and tk > 128:
        tk = max(128, _round_up(tk // 2, 128))
    while not fits() and tn > 128:
        tn = max(128, _round_up(tn // 2, 128))
    while not fits() and tm > sl:
        tm = max(sl, _round_up(tm // 2, sl))

    # Balance tile sizes to block counts to minimize zero-padding waste.
    nk = _cdiv(Kr, tk)
    tk = _round_up(_cdiv(Kr, nk), 128)
    nn = _cdiv(Nr, tn)
    tn = _round_up(_cdiv(Nr, nn), 128)
    nm = _cdiv(Mr, tm)
    tm = _round_up(_cdiv(Mr, nm), sl)

    single_k = (nk == 1)
    Mp = _round_up(M, tm)
    Kp = _round_up(K, tk)
    Np = _round_up(N, tn)
    nm, nn, nk = Mp // tm, Np // tn, Kp // tk

    # --- operand cast / padding: only when actually required.
    xp = x2 if x2.dtype == cd else x2.astype(cd)
    if (Mp, Kp) != (M, K):
        xp = jnp.pad(xp, ((0, Mp - M), (0, Kp - K)))
    wp = w if w.dtype == cd else w.astype(cd)
    if (Kp, Np) != (K, N):
        wp = jnp.pad(wp, ((0, Kp - K), (0, Np - N)))
    bp = b.astype(jnp.float32).reshape(1, N)
    if Np != N:
        bp = jnp.pad(bp, ((0, 0), (0, Np - N)))

    # --- grid / specs. n outer (weight block reused across the m sweep),
    # m middle, k (reduction) innermost.
    if single_k:
        kernel = _fc_kernel_single_k
        grid = (nn, nm)
        in_specs = [
            pl.BlockSpec((tm, tk), lambda n, m: (m, 0)),
            pl.BlockSpec((tk, tn), lambda n, m: (0, n)),
            pl.BlockSpec((1, tn), lambda n, m: (0, n)),
        ]
        out_specs = pl.BlockSpec((tm, tn), lambda n, m: (m, n))
        scratch_shapes = ()
        dims = ("parallel", "parallel")
        w_reads = 1            # weight streamed exactly once
    else:
        grid = (nn, nm, nk)
        in_specs = [
            pl.BlockSpec((tm, tk), lambda n, m, k: (m, k)),
            pl.BlockSpec((tk, tn), lambda n, m, k: (k, n)),
            pl.BlockSpec((1, tn), lambda n, m, k: (0, n)),
        ]
        out_specs = pl.BlockSpec((tm, tn), lambda n, m, k: (m, n))
        dims = ("parallel", "parallel", "arbitrary")
        if jnp.dtype(out_dtype) == jnp.dtype(jnp.float32):
            kernel = _fc_kernel_multik_f32out
            scratch_shapes = ()
        else:
            kernel = _fc_kernel_multik_acc
            scratch_shapes = [pltpu.VMEM((tm, tn), jnp.float32)]
        w_reads = nm

    cost = pl.CostEstimate(
        flops=2 * M * K * N,
        transcendentals=0,
        bytes_accessed=(cd_isz * (nn * Mp * Kp + w_reads * Kp * Np)
                        + 4 * Np + out_isz * Mp * Np),
    )

    out_padded = pl.pallas_call(
        kernel,
        out_shape=jax.ShapeDtypeStruct((Mp, Np), out_dtype),
        grid_spec=pltpu.PrefetchScalarGridSpec(
            num_scalar_prefetch=0,
            grid=grid,
            in_specs=in_specs,
            out_specs=out_specs,
            scratch_shapes=scratch_shapes,
        ),
        compiler_params=pltpu.CompilerParams(
            dimension_semantics=dims,
            vmem_limit_bytes=vmem_limit,
        ),
        cost_estimate=cost,
    )(xp, wp, bp)

    out = out_padded
    if (Mp, Np) != (M, N):
        out = out[:M, :N]
    return out.reshape(*orig_shape[:-1], N)


# ---------------------------------------------------------------------------
# Self-test
# ---------------------------------------------------------------------------

if __name__ == "__main__":
    key = jax.random.PRNGKey(0)
    ks = jax.random.split(key, 8)

    # FC module: in_features=32, out_features=64 (torch stores weight (out, in)).
    in_features, out_features = 32, 64
    weight = jax.random.normal(ks[0], (out_features, in_features), jnp.float32) * 0.1
    bias = jax.random.normal(ks[1], (out_features,), jnp.float32) * 0.1
    w_t = weight.T  # (in_features, out_features)

    # Case 1: batched input (2, 8, 32), default bf16 operand path.
    x = jax.random.normal(ks[2], (2, 8, in_features), jnp.float32)
    out = jax.block_until_ready(fc_forward(x, w_t, bias))
    ref = jnp.maximum(x @ w_t + bias, 0.0)
    assert out.shape == (2, 8, out_features)
    assert jnp.allclose(out, ref, atol=2e-2, rtol=2e-2), "bf16 default path mismatch"

    # Case 2: same input, strict f32 operand path (single-K kernel).
    out_f32 = jax.block_until_ready(fc_forward(x, w_t, bias, compute_dtype=jnp.float32))
    assert jnp.allclose(out_f32, ref, atol=1e-5, rtol=1e-5), "f32 path mismatch"

    # Case 3: ragged shapes + forced K split (padding + accumulate-into-f32-output path).
    M2, K2, N2 = 40, 300, 200
    x2 = jax.random.normal(ks[3], (M2, K2), jnp.float32)
    w2 = jax.random.normal(ks[4], (K2, N2), jnp.float32) * 0.05
    b2 = jax.random.normal(ks[5], (N2,), jnp.float32) * 0.1
    out2 = jax.block_until_ready(
        fc_forward(x2, w2, b2, tile_k=128, compute_dtype=jnp.float32))
    ref2 = jnp.maximum(x2 @ w2 + b2, 0.0)
    assert out2.shape == (M2, N2)
    assert jnp.allclose(out2, ref2, atol=1e-4, rtol=1e-4), "multi-K f32 mismatch"

    # Case 4: bf16 in/out with forced K split (exercises the f32 scratch accumulator).
    x3 = jax.random.normal(ks[6], (16, 256), jnp.float32).astype(jnp.bfloat16)
    w3 = (jax.random.normal(ks[7], (256, 128), jnp.float32) * 0.05).astype(jnp.bfloat16)
    b3 = jnp.zeros((128,), jnp.bfloat16)
    out3 = jax.block_until_ready(fc_forward(x3, w3, b3, tile_k=128))
    ref3 = jnp.maximum(
        x3.astype(jnp.float32) @ w3.astype(jnp.float32) + b3.astype(jnp.float32), 0.0)
    assert out3.dtype == jnp.bfloat16
    assert jnp.allclose(out3.astype(jnp.float32), ref3, atol=5e-2, rtol=5e-2), \
        "bf16 scratch accumulator path mismatch"

    print("KERNEL_OK")
</pallas_src>

<mosaic_0001>
module attributes {stable_mosaic.version = 11 : i64} {
  func.func @_fc_kernel_single_k(%arg0: i32, %arg1: i32, %arg2: memref<16x128xbf16, #tpu.memory_space<vmem>>, %arg3: memref<128x128xbf16, #tpu.memory_space<vmem>>, %arg4: memref<1x128xf32, #tpu.memory_space<vmem>>, %arg5: memref<16x128xf32, #tpu.memory_space<vmem>>) attributes {dimension_semantics = [#tpu.dimension_semantics<parallel>, #tpu.dimension_semantics<parallel>], iteration_bounds = array<i64: 1, 1>, scalar_prefetch = 0 : i64, scratch_operands = 0 : i64, tpu.core_type = #tpu.core_type<tc>, window_params = [{transform_indices = @transform_0, window_bounds = array<i64: 16, 128>}, {transform_indices = @transform_1, window_bounds = array<i64: 128, 128>}, {transform_indices = @transform_2, window_bounds = array<i64: 1, 128>}, {transform_indices = @transform_3, window_bounds = array<i64: 16, 128>}]} {
    %c0 = arith.constant 0 : index
    %c0_0 = arith.constant 0 : index
    %0 = vector.load %arg2[%c0, %c0_0] : memref<16x128xbf16, #tpu.memory_space<vmem>>, vector<16x128xbf16>
    %c0_1 = arith.constant 0 : index
    %c0_2 = arith.constant 0 : index
    %1 = vector.load %arg3[%c0_1, %c0_2] : memref<128x128xbf16, #tpu.memory_space<vmem>>, vector<128x128xbf16>
    %cst = arith.constant dense<0.000000e+00> : vector<16x128xf32>
    %2 = tpu.matmul %0, %1, %cst {dimension_numbers = #tpu.dot_dimension_numbers<[1], [0], [0], [1], [0, 0, 1, 1], [], []>} : vector<16x128xbf16>, vector<128x128xbf16>, vector<16x128xf32> -> vector<16x128xf32>
    %c0_3 = arith.constant 0 : index
    %c0_4 = arith.constant 0 : index
    %3 = vector.load %arg4[%c0_3, %c0_4] : memref<1x128xf32, #tpu.memory_space<vmem>>, vector<1x128xf32>
    %4 = vector.broadcast %3 : vector<1x128xf32> to vector<16x128xf32>
    %5 = arith.addf %2, %4 : vector<16x128xf32>
    %cst_5 = arith.constant 0.000000e+00 : f32
    %6 = vector.broadcast %cst_5 : f32 to vector<16x128xf32>
    %7 = arith.maximumf %5, %6 : vector<16x128xf32>
    %c0_6 = arith.constant 0 : index
    %c0_7 = arith.constant 0 : index
    %8 = vector.load %arg5[%c0_6, %c0_7] : memref<16x128xf32, #tpu.memory_space<vmem>>, vector<16x128xf32>
    tpu.vector_store %arg5[%c0_6, %c0_7], %7 {strides = array<i32>} : memref<16x128xf32, #tpu.memory_space<vmem>>, vector<16x128xf32>,
    return
  }
  func.func @transform_0(%arg0: i32, %arg1: i32) -> (i32, i32) {
    %c0_i32 = arith.constant 0 : i32
    %c0_i32_0 = arith.constant 0 : i32
    return %arg1, %c0_i32 : i32, i32
  }
  func.func @transform_1(%arg0: i32, %arg1: i32) -> (i32, i32) {
    %c0_i32 = arith.constant 0 : i32
    %c0_i32_0 = arith.constant 0 : i32
    return %c0_i32, %arg0 : i32, i32
  }
  func.func @transform_2(%arg0: i32, %arg1: i32) -> (i32, i32) {
    %c0_i32 = arith.constant 0 : i32
    %c0_i32_0 = arith.constant 0 : i32
    return %c0_i32, %arg0 : i32, i32
  }
  func.func @transform_3(%arg0: i32, %arg1: i32) -> (i32, i32) {
    %c0_i32 = arith.constant 0 : i32
    return %arg1, %arg0 : i32, i32
  }
}

</mosaic_0001>

<llo_original>
// kernel: tpu_custom_call.1
$region0: #{tpu_custom_call.1}
  #allocation0 [shape = 'u32[]', space=smem, size = 0x4, offset = 0x4, fixed_abs, tag = 'smem constant byte address 0x4 - core index']
  #allocation1 [shape = 'u32[144,128]{1,0:T(1,128)}', space=vmem, size = 0x12000, scoped, tag = 'internal scratch']
  %s0 = inlined_call_operand.hbm [shape: bf16[16,128], index: 0, kind: input, shape index: {}]
  %s1 = inlined_call_operand.hbm [shape: bf16[128,128], index: 1, kind: input, shape index: {}]
  %s2 = inlined_call_operand.vmem [shape: f32[1,128], index: 2, kind: input, shape index: {}]
  %s3 = inlined_call_operand.hbm [shape: f32[16,128], index: 3, kind: output, shape index: {}]
  %s4 = sld [smem:[#allocation0]]
  $region30: #{tpu_custom_call.1} parent=0
    _
  %s6 = ssub.s32 1, %s4
  %s7 = scalar_select 0, %s6, %s4
  $region1: #{tpu_custom_call.1} parent=0
    #allocation2 [shape = 'u8[4096]{0}', space=vmem, size = 0x1000, scoped, tag = 'input window, operand 0, single buffered']
    #allocation3 [shape = 's32[1]{0}', space=sflag, size = 0x4, scoped, tag = 'scoped memory for tpu_custom_call.1']
    #allocation4 [shape = 's32[1]{0}', space=sflag, size = 0x4, scoped, tag = 'scoped memory for tpu_custom_call.1']
    #allocation5 [shape = 'u8[32768]{0}', space=vmem, size = 0x8000, scoped, tag = 'input window, operand 1, single buffered']
    #allocation6 [shape = 's32[1]{0}', space=sflag, size = 0x4, scoped, tag = 'scoped memory for tpu_custom_call.1']
    #allocation7 [shape = 'u8[8192]{0}', space=vmem, size = 0x2000, scoped, tag = 'output window, operand 0, single buffered']
    %8 = vsyncpa [#allocation3], 0
    %9 = vsyncpa [#allocation6], 0
    %10 = vsyncpa [#allocation4], 0
    // Predicated region
    $region2: #{tpu_custom_call.1} parent=1 // pred_check
      _
    $region3: #{tpu_custom_call.1} parent=1 // pred_check_branch
      %12 = sbr.rel (0) target = $region5
    $region4: #{tpu_custom_call.1} parent=1 // pred_region
      %s14 = ssub.s32 128, 128
      %15 = vsyncadd [#allocation3], %s14
      %s16 = sshll.u32 [#allocation2], 4
      %s17 = int_to_ptr.vmem [resolvable:$true] %s16
      %22 = dma.hbm_to_vmem [thread:$0]  %s0, 128, %s17, [#allocation3], 64, 64, 4
    $region5: #{tpu_custom_call.1} parent=1 // pred_fallthru
      _
    // Predicated region
    $region6: #{tpu_custom_call.1} parent=1 // pred_check
      _
    $region7: #{tpu_custom_call.1} parent=1 // pred_check_branch
      %24 = sbr.rel (0) target = $region9
    $region8: #{tpu_custom_call.1} parent=1 // pred_region
      %s26 = ssub.s32 1024, 1024
      %27 = vsyncadd [#allocation6], %s26
      %s28 = sshll.u32 [#allocation5], 4
      %s29 = int_to_ptr.vmem [resolvable:$true] %s28
      %34 = dma.hbm_to_vmem [thread:$0]  %s1, 1024, %s29, [#allocation6], 64, 64, 4
    $region9: #{tpu_custom_call.1} parent=1 // pred_fallthru
      _
    // Predicated region
    $region10: #{tpu_custom_call.1} parent=1 // pred_check
      _
    $region11: #{tpu_custom_call.1} parent=1 // pred_check_branch
      %36 = sbr.rel (0) target = $region13
    $region12: #{tpu_custom_call.1} parent=1 // pred_region
      _
    $region13: #{tpu_custom_call.1} parent=1 // pred_fallthru
      _
    // Predicated region
    $region14: #{tpu_custom_call.1} parent=1 // pred_check
      _
    $region15: #{tpu_custom_call.1} parent=1 // pred_check_branch
      %38 = sbr.rel (0) target = $region17
    $region16: #{tpu_custom_call.1} parent=1 // pred_region
      %39 = dma.done [#allocation3], 128
    $region17: #{tpu_custom_call.1} parent=1 // pred_fallthru
      _
    // Predicated region
    $region18: #{tpu_custom_call.1} parent=1 // pred_check
      _
    $region19: #{tpu_custom_call.1} parent=1 // pred_check_branch
      %41 = sbr.rel (0) target = $region21
    $region20: #{tpu_custom_call.1} parent=1 // pred_region
      %42 = dma.done [#allocation6], 1024
    $region21: #{tpu_custom_call.1} parent=1 // pred_fallthru
      _
    %v44 = vld [vmem:[#allocation2] sm:$0xf]
    %v45 = vld [vmem:[#allocation2 + $0x4] sm:$0xf]
    %v46 = vld [vmem:[#allocation5] sm:$0xf]
    %v47 = vld [vmem:[#allocation5 + $0x4] sm:$0xf]
    %v48 = vld [vmem:[#allocation5 + $0x8] sm:$0xf]
    %v49 = vld [vmem:[#allocation5 + $0xc] sm:$0xf]
    %v50 = vld [vmem:[#allocation5 + $0x10] sm:$0xf]
    %v51 = vld [vmem:[#allocation5 + $0x14] sm:$0xf]
    %v52 = vld [vmem:[#allocation5 + $0x18] sm:$0xf]
    %v53 = vld [vmem:[#allocation5 + $0x1c] sm:$0xf]
    %v54 = vld [vmem:[#allocation5 + $0x20] sm:$0xf]
    %v55 = vld [vmem:[#allocation5 + $0x24] sm:$0xf]
    %v56 = vld [vmem:[#allocation5 + $0x28] sm:$0xf]
    %v57 = vld [vmem:[#allocation5 + $0x2c] sm:$0xf]
    %v58 = vld [vmem:[#allocation5 + $0x30] sm:$0xf]
    %v59 = vld [vmem:[#allocation5 + $0x34] sm:$0xf]
    %v60 = vld [vmem:[#allocation5 + $0x38] sm:$0xf]
    %v61 = vld [vmem:[#allocation5 + $0x3c] sm:$0xf]
    %v62 = vld [vmem:[%s2] sm:$0x1]
    %v64 = vlaneseq
    %v65 = vshrl.u32 %v64, 7
    %v66 = vsub.s32 0, %v65
    %v67 = vrot.slane %v62, %v66
    %v71 = vunpack.c.l.b16 %v44
    %v72 = vunpack.c.l.b16 %v45
    %v73 = vpack.c.b16 %v72, %v71
    %v91 = vunpack.c.l.b16 %v46
    %v92 = vunpack.c.l.b16 %v47
    %v93 = vunpack.c.l.b16 %v48
    %v94 = vunpack.c.l.b16 %v49
    %v95 = vunpack.c.l.b16 %v50
    %v96 = vunpack.c.l.b16 %v51
    %v97 = vunpack.c.l.b16 %v52
    %v98 = vunpack.c.l.b16 %v53
    %v99 = vunpack.c.l.b16 %v54
    %v100 = vunpack.c.l.b16 %v55
    %v101 = vunpack.c.l.b16 %v56
    %v102 = vunpack.c.l.b16 %v57
    %v103 = vunpack.c.l.b16 %v58
    %v104 = vunpack.c.l.b16 %v59
    %v105 = vunpack.c.l.b16 %v60
    %v106 = vunpack.c.l.b16 %v61
    %v107 = vpack.c.b16 %v92, %v91
    %v108 = vpack.c.b16 %v94, %v93
    %v109 = vpack.c.b16 %v96, %v95
    %v110 = vpack.c.b16 %v98, %v97
    %v111 = vpack.c.b16 %v100, %v99
    %v112 = vpack.c.b16 %v102, %v101
    %v113 = vpack.c.b16 %v104, %v103
    %v114 = vpack.c.b16 %v106, %v105
    %123 = vmatprep.subr.bf16.mxu0 0
    %124 = vmatpush1.bf16.msra.mxu0 %v107
    %125 = vmatprep.subr.bf16.mxu0 0
    %126 = vmatpush1.bf16.msra.mxu0 %v108
    %127 = vmatprep.subr.bf16.mxu0 0
    %128 = vmatpush1.bf16.msra.mxu0 %v109
    %129 = vmatprep.subr.bf16.mxu0 0
    %130 = vmatpush1.bf16.msra.mxu0 %v110
    %131 = vmatprep.subr.bf16.mxu0 0
    %132 = vmatpush1.bf16.msra.mxu0 %v111
    %133 = vmatprep.subr.bf16.mxu0 0
    %134 = vmatpush1.bf16.msra.mxu0 %v112
    %135 = vmatprep.subr.bf16.mxu0 0
    %136 = vmatpush1.bf16.msra.mxu0 %v113
    %137 = vmatprep.subr.bf16.mxu0 0
    %138 = vmatpush1.bf16.msra.mxu0 %v114
    %139 = vmatprep.subr.bf16.mxu0 0
    %140 = vmatpush1.bf16.msra.mxu0 0
    %141 = vmatprep.subr.bf16.mxu0 0
    %142 = vmatpush1.bf16.msra.mxu0 0
    %143 = vmatprep.subr.bf16.mxu0 0
    %144 = vmatpush1.bf16.msra.mxu0 0
    %145 = vmatprep.subr.bf16.mxu0 0
    %146 = vmatpush1.bf16.msra.mxu0 0
    %147 = vmatprep.subr.bf16.mxu0 0
    %148 = vmatpush1.bf16.msra.mxu0 0
    %149 = vmatprep.subr.bf16.mxu0 0
    %150 = vmatpush1.bf16.msra.mxu0 0
    %151 = vmatprep.subr.bf16.mxu0 0
    %152 = vmatpush1.bf16.msra.mxu0 0
    %153 = vmatprep.subr.bf16.mxu0 0
    %154 = vmatpush1.bf16.msra.mxu0 0
    %155 = vmatprep.mubr.bf16.mxu0 0
    %156 = vmatmul.mubr.bf16.gmra.mrb[0].mxu0 %v73
    %v157 = vpop.f32.mrb[0].mxu0
    %v158 = vadd.f32 %v67, %v157
    %v159 = vpop.f32.mrb[0].mxu0
    %v160 = vpop.f32.mrb[0].mxu0
    %v161 = vadd.f32 %v67, %v160
    %v162 = vpop.f32.mrb[0].mxu0
    %163 = vdwg.mxu0
    %v164 = vmax.f32 %v158, 0.0
    %v165 = vmax.f32 %v161, 0.0
    %166 = vst [vmem:[#allocation7] sm:$0xff] %v164
    %167 = vst [vmem:[#allocation7 + $0x8] sm:$0xff] %v165
    // Predicated region
    $region22: #{tpu_custom_call.1} parent=1 // pred_check
      _
    $region23: #{tpu_custom_call.1} parent=1 // pred_check_branch
      %169 = sbr.rel (0) target = $region25
    $region24: #{tpu_custom_call.1} parent=1 // pred_region
      %s171 = ssub.s32 256, 256
      %172 = vsyncadd [#allocation4], %s171
      %s173 = sshll.u32 [#allocation7], 4
      %s174 = int_to_ptr.vmem [resolvable:$true] %s173
      %179 = dma.vmem_to_hbm [thread:$0]  %s174, 256, %s3, [#allocation4], 128, 128, 8
    $region25: #{tpu_custom_call.1} parent=1 // pred_fallthru
      _
    // Predicated region
    $region26: #{tpu_custom_call.1} parent=1 // pred_check
      _
    $region27: #{tpu_custom_call.1} parent=1 // pred_check_branch
      %181 = sbr.rel (0) target = $region29
    $region28: #{tpu_custom_call.1} parent=1 // pred_region
      %182 = dma.done [#allocation4], 256
    $region29: #{tpu_custom_call.1} parent=1 // pred_fallthru
      _
    %183 = vsyncpa [#allocation3], 1
    %184 = vsyncpa [#allocation6], 1
    %185 = vsyncpa [#allocation4], 1

</llo_original>
